<compile_context>
chip_gen: v6e
topology: v6e:2x2x1
jax: 0.10.0
libtpu: 0.0.40
codegen_flags: <defaults>
</compile_context>

<pallas_src>
import functools

import jax
import jax.numpy as jnp
from jax.experimental import pallas as pl
from jax.experimental.pallas import tpu as pltpu

BN_EPS = 1e-5
HIDDEN = 256
NUM_CLASSES = 2
OUT_PAD = 128   # lane-dense padded output width
F_PAD = 128     # lane-dense padded feature width
TB = 128        # batch tile (rows per grid step)


def crypto_nn_kernel(x_ref, w1_ref, b1_ref, w2_ref, b2_ref, w3_ref, b3_ref,
                     out_ref):
    # x_ref: [TB, F_PAD] bf16 ; weights bf16 ; biases f32 ; out f32
    x = x_ref[...]

    # fc1 (+ folded bn1) + relu
    h = jnp.dot(x, w1_ref[...], preferred_element_type=jnp.float32) + b1_ref[...]
    h = jnp.maximum(h, 0.0).astype(jnp.bfloat16)

    # fc2 (+ folded bn2) + relu
    h = jnp.dot(h, w2_ref[...], preferred_element_type=jnp.float32) + b2_ref[...]
    h = jnp.maximum(h, 0.0).astype(jnp.bfloat16)

    # fc3 (logits, padded to 128 lanes; extra columns are zero)
    out_ref[...] = (
        jnp.dot(h, w3_ref[...], preferred_element_type=jnp.float32) + b3_ref[...]
    )


def _fold_bn(w, b, gamma, beta, mu, var):
    """Fold eval-mode BatchNorm1d into the preceding Linear.

    w: [in, out], b/gamma/beta/mu/var: [1, out].
    """
    scale = gamma * jax.lax.rsqrt(var + BN_EPS)          # [1, out]
    w_f = w * scale                                      # broadcast over rows
    b_f = (b - mu) * scale + beta
    return w_f, b_f


@functools.partial(jax.jit, static_argnames=())
def crypto_nn_forward(x, params):
    """x: [B, num_feats] float32. params: dict (see init_params). Returns [B, 2] f32."""
    B, F = x.shape

    # --- fold BN into fc1 / fc2 (constant at inference) ---
    w1f, b1f = _fold_bn(params["w1"], params["b1"], params["g1"],
                        params["be1"], params["mu1"], params["var1"])
    w2f, b2f = _fold_bn(params["w2"], params["b2"], params["g2"],
                        params["be2"], params["mu2"], params["var2"])
    w3, b3 = params["w3"], params["b3"]

    # --- pad shapes to lane-dense widths / batch tile ---
    B_pad = pl.cdiv(B, TB) * TB
    x_p = jnp.zeros((B_pad, F_PAD), jnp.float32).at[:B, :F].set(x)
    w1_p = jnp.zeros((F_PAD, HIDDEN), jnp.float32).at[:F, :].set(w1f)
    w3_p = jnp.zeros((HIDDEN, OUT_PAD), jnp.float32).at[:, :NUM_CLASSES].set(w3)
    b3_p = jnp.zeros((1, OUT_PAD), jnp.float32).at[:, :NUM_CLASSES].set(b3)

    # --- bf16 matmul inputs (accumulation stays f32 in the kernel) ---
    x_bf = x_p.astype(jnp.bfloat16)
    w1_bf = w1_p.astype(jnp.bfloat16)
    w2_bf = w2f.astype(jnp.bfloat16)
    w3_bf = w3_p.astype(jnp.bfloat16)

    grid = (B_pad // TB,)
    resident = lambda i: (0, 0)          # weights/biases stay resident across steps

    out_padded = pl.pallas_call(
        crypto_nn_kernel,
        out_shape=jax.ShapeDtypeStruct((B_pad, OUT_PAD), jnp.float32),
        grid_spec=pltpu.PrefetchScalarGridSpec(
            num_scalar_prefetch=0,
            grid=grid,
            in_specs=[
                pl.BlockSpec((TB, F_PAD), lambda i: (i, 0)),      # x tile
                pl.BlockSpec((F_PAD, HIDDEN), resident),          # w1
                pl.BlockSpec((1, HIDDEN), resident),              # b1
                pl.BlockSpec((HIDDEN, HIDDEN), resident),         # w2
                pl.BlockSpec((1, HIDDEN), resident),              # b2
                pl.BlockSpec((HIDDEN, OUT_PAD), resident),        # w3
                pl.BlockSpec((1, OUT_PAD), resident),             # b3
            ],
            out_specs=pl.BlockSpec((TB, OUT_PAD), lambda i: (i, 0)),
        ),
        compiler_params=pltpu.CompilerParams(
            dimension_semantics=("parallel",),
            vmem_limit_bytes=32 * 1024 * 1024,
        ),
    )(x_bf, w1_bf, b1f, w2_bf, b2f, w3_bf, b3_p)

    return out_padded[:B, :NUM_CLASSES]


def init_params(key, num_feats, hidden=HIDDEN, num_classes=NUM_CLASSES):
    ks = jax.random.split(key, 10)
    f32 = jnp.float32
    params = {
        # Linear weights stored as [in, out] (transposed vs. PyTorch's [out, in]).
        "w1": jax.random.normal(ks[0], (num_feats, hidden), f32) * 0.05,
        "b1": jax.random.normal(ks[1], (1, hidden), f32) * 0.05,
        "w2": jax.random.normal(ks[2], (hidden, hidden), f32) * 0.05,
        "b2": jax.random.normal(ks[3], (1, hidden), f32) * 0.05,
        "w3": jax.random.normal(ks[4], (hidden, num_classes), f32) * 0.05,
        "b3": jax.random.normal(ks[5], (1, num_classes), f32) * 0.05,
        # BatchNorm1d affine params + running stats (eval mode).
        "g1": 1.0 + 0.1 * jax.random.normal(ks[6], (1, hidden), f32),
        "be1": 0.1 * jax.random.normal(ks[7], (1, hidden), f32),
        "mu1": 0.1 * jax.random.normal(ks[8], (1, hidden), f32),
        "var1": 0.5 + jax.random.uniform(ks[9], (1, hidden), f32),
        "g2": jnp.ones((1, hidden), f32),
        "be2": jnp.zeros((1, hidden), f32),
        "mu2": jnp.zeros((1, hidden), f32),
        "var2": jnp.ones((1, hidden), f32),
    }
    return params


def crypto_nn_reference(x, p):
    h = x @ p["w1"] + p["b1"]
    h = (h - p["mu1"]) / jnp.sqrt(p["var1"] + BN_EPS) * p["g1"] + p["be1"]
    h = jnp.maximum(h, 0.0)
    h = h @ p["w2"] + p["b2"]
    h = (h - p["mu2"]) / jnp.sqrt(p["var2"] + BN_EPS) * p["g2"] + p["be2"]
    h = jnp.maximum(h, 0.0)
    return h @ p["w3"] + p["b3"]


if __name__ == "__main__":
    B, NUM_FEATS = 8, 32
    key = jax.random.PRNGKey(0)
    k_x, k_p = jax.random.split(key)
    x = jax.random.normal(k_x, (B, NUM_FEATS), jnp.float32)
    params = init_params(k_p, NUM_FEATS)

    out = crypto_nn_forward(x, params)
    out = jax.block_until_ready(out)

    ref = crypto_nn_reference(x, params)
    assert out.shape == (B, NUM_CLASSES), f"bad output shape {out.shape}"
    # bf16 MXU inputs (f32 accumulation) -> loosened tolerance vs f32 reference.
    assert jnp.allclose(out, ref, atol=2e-2, rtol=2e-2), "mismatch vs reference"
    print("KERNEL_OK")
</pallas_src>

<mosaic_0001>
module attributes {stable_mosaic.version = 11 : i64} {
  func.func @crypto_nn_kernel(%arg0: i32, %arg1: memref<128x128xbf16, #tpu.memory_space<vmem>>, %arg2: memref<128x256xbf16, #tpu.memory_space<vmem>>, %arg3: memref<1x256xf32, #tpu.memory_space<vmem>>, %arg4: memref<256x256xbf16, #tpu.memory_space<vmem>>, %arg5: memref<1x256xf32, #tpu.memory_space<vmem>>, %arg6: memref<256x128xbf16, #tpu.memory_space<vmem>>, %arg7: memref<1x128xf32, #tpu.memory_space<vmem>>, %arg8: memref<128x128xf32, #tpu.memory_space<vmem>>) attributes {dimension_semantics = [#tpu.dimension_semantics<parallel>], iteration_bounds = array<i64: 1>, scalar_prefetch = 0 : i64, scratch_operands = 0 : i64, tpu.core_type = #tpu.core_type<tc>, window_params = [{transform_indices = @transform_0, window_bounds = array<i64: 128, 128>}, {pipeline_mode = #tpu.pipeline_mode<synchronous>, transform_indices = @transform_1, window_bounds = array<i64: 128, 256>}, {pipeline_mode = #tpu.pipeline_mode<synchronous>, transform_indices = @transform_2, window_bounds = array<i64: 1, 256>}, {pipeline_mode = #tpu.pipeline_mode<synchronous>, transform_indices = @transform_3, window_bounds = array<i64: 256, 256>}, {pipeline_mode = #tpu.pipeline_mode<synchronous>, transform_indices = @transform_4, window_bounds = array<i64: 1, 256>}, {pipeline_mode = #tpu.pipeline_mode<synchronous>, transform_indices = @transform_5, window_bounds = array<i64: 256, 128>}, {pipeline_mode = #tpu.pipeline_mode<synchronous>, transform_indices = @transform_6, window_bounds = array<i64: 1, 128>}, {transform_indices = @transform_7, window_bounds = array<i64: 128, 128>}]} {
    %c0 = arith.constant 0 : index
    %c0_0 = arith.constant 0 : index
    %0 = vector.load %arg1[%c0, %c0_0] : memref<128x128xbf16, #tpu.memory_space<vmem>>, vector<128x128xbf16>
    %c0_1 = arith.constant 0 : index
    %c0_2 = arith.constant 0 : index
    %1 = vector.load %arg2[%c0_1, %c0_2] : memref<128x256xbf16, #tpu.memory_space<vmem>>, vector<128x256xbf16>
    %cst = arith.constant dense<0.000000e+00> : vector<128x256xf32>
    %2 = tpu.matmul %0, %1, %cst {dimension_numbers = #tpu.dot_dimension_numbers<[1], [0], [0], [1], [0, 0, 1, 1], [], []>} : vector<128x128xbf16>, vector<128x256xbf16>, vector<128x256xf32> -> vector<128x256xf32>
    %c0_3 = arith.constant 0 : index
    %c0_4 = arith.constant 0 : index
    %3 = vector.load %arg3[%c0_3, %c0_4] : memref<1x256xf32, #tpu.memory_space<vmem>>, vector<1x256xf32>
    %4 = vector.broadcast %3 : vector<1x256xf32> to vector<128x256xf32>
    %5 = arith.addf %2, %4 : vector<128x256xf32>
    %cst_5 = arith.constant 0.000000e+00 : f32
    %6 = vector.broadcast %cst_5 : f32 to vector<128x256xf32>
    %7 = arith.maximumf %5, %6 : vector<128x256xf32>
    %8 = arith.truncf %7 : vector<128x256xf32> to vector<128x256xbf16>
    %c0_6 = arith.constant 0 : index
    %c0_7 = arith.constant 0 : index
    %9 = vector.load %arg4[%c0_6, %c0_7] : memref<256x256xbf16, #tpu.memory_space<vmem>>, vector<256x256xbf16>
    %cst_8 = arith.constant dense<0.000000e+00> : vector<128x256xf32>
    %10 = tpu.matmul %8, %9, %cst_8 {dimension_numbers = #tpu.dot_dimension_numbers<[1], [0], [0], [1], [0, 0, 1, 1], [], []>} : vector<128x256xbf16>, vector<256x256xbf16>, vector<128x256xf32> -> vector<128x256xf32>
    %c0_9 = arith.constant 0 : index
    %c0_10 = arith.constant 0 : index
    %11 = vector.load %arg5[%c0_9, %c0_10] : memref<1x256xf32, #tpu.memory_space<vmem>>, vector<1x256xf32>
    %12 = vector.broadcast %11 : vector<1x256xf32> to vector<128x256xf32>
    %13 = arith.addf %10, %12 : vector<128x256xf32>
    %cst_11 = arith.constant 0.000000e+00 : f32
    %14 = vector.broadcast %cst_11 : f32 to vector<128x256xf32>
    %15 = arith.maximumf %13, %14 : vector<128x256xf32>
    %16 = arith.truncf %15 : vector<128x256xf32> to vector<128x256xbf16>
    %c0_12 = arith.constant 0 : index
    %c0_13 = arith.constant 0 : index
    %17 = vector.load %arg6[%c0_12, %c0_13] : memref<256x128xbf16, #tpu.memory_space<vmem>>, vector<256x128xbf16>
    %cst_14 = arith.constant dense<0.000000e+00> : vector<128x128xf32>
    %18 = tpu.matmul %16, %17, %cst_14 {dimension_numbers = #tpu.dot_dimension_numbers<[1], [0], [0], [1], [0, 0, 1, 1], [], []>} : vector<128x256xbf16>, vector<256x128xbf16>, vector<128x128xf32> -> vector<128x128xf32>
    %c0_15 = arith.constant 0 : index
    %c0_16 = arith.constant 0 : index
    %19 = vector.load %arg7[%c0_15, %c0_16] : memref<1x128xf32, #tpu.memory_space<vmem>>, vector<1x128xf32>
    %20 = vector.broadcast %19 : vector<1x128xf32> to vector<128x128xf32>
    %21 = arith.addf %18, %20 : vector<128x128xf32>
    %c0_17 = arith.constant 0 : index
    %c0_18 = arith.constant 0 : index
    %22 = vector.load %arg8[%c0_17, %c0_18] : memref<128x128xf32, #tpu.memory_space<vmem>>, vector<128x128xf32>
    tpu.vector_store %arg8[%c0_17, %c0_18], %21 {strides = array<i32>} : memref<128x128xf32, #tpu.memory_space<vmem>>, vector<128x128xf32>,
    return
  }
  func.func @transform_0(%arg0: i32) -> (i32, i32) {
    %c0_i32 = arith.constant 0 : i32
    %c0_i32_0 = arith.constant 0 : i32
    return %arg0, %c0_i32 : i32, i32
  }
  func.func @transform_1(%arg0: i32) -> (i32, i32) {
    %c0_i32 = arith.constant 0 : i32
    %c0_i32_0 = arith.constant 0 : i32
    %c0_i32_1 = arith.constant 0 : i32
    return %c0_i32, %c0_i32_0 : i32, i32
  }
  func.func @transform_2(%arg0: i32) -> (i32, i32) {
    %c0_i32 = arith.constant 0 : i32
    %c0_i32_0 = arith.constant 0 : i32
    %c0_i32_1 = arith.constant 0 : i32
    return %c0_i32, %c0_i32_0 : i32, i32
  }
  func.func @transform_3(%arg0: i32) -> (i32, i32) {
    %c0_i32 = arith.constant 0 : i32
    %c0_i32_0 = arith.constant 0 : i32
    %c0_i32_1 = arith.constant 0 : i32
    return %c0_i32, %c0_i32_0 : i32, i32
  }
  func.func @transform_4(%arg0: i32) -> (i32, i32) {
    %c0_i32 = arith.constant 0 : i32
    %c0_i32_0 = arith.constant 0 : i32
    %c0_i32_1 = arith.constant 0 : i32
    return %c0_i32, %c0_i32_0 : i32, i32
  }
  func.func @transform_5(%arg0: i32) -> (i32, i32) {
    %c0_i32 = arith.constant 0 : i32
    %c0_i32_0 = arith.constant 0 : i32
    %c0_i32_1 = arith.constant 0 : i32
    return %c0_i32, %c0_i32_0 : i32, i32
  }
  func.func @transform_6(%arg0: i32) -> (i32, i32) {
    %c0_i32 = arith.constant 0 : i32
    %c0_i32_0 = arith.constant 0 : i32
    %c0_i32_1 = arith.constant 0 : i32
    return %c0_i32, %c0_i32_0 : i32, i32
  }
  func.func @transform_7(%arg0: i32) -> (i32, i32) {
    %c0_i32 = arith.constant 0 : i32
    %c0_i32_0 = arith.constant 0 : i32
    return %arg0, %c0_i32 : i32, i32
  }
}

</mosaic_0001>

<llo_original>
// kernel: crypto_nn_forward.1
$region0: #{crypto_nn_forward.1}
  #allocation0 [shape = 'u32[]', space=smem, size = 0x4, offset = 0x4, fixed_abs, tag = 'smem constant byte address 0x4 - core index']
  #allocation1 [shape = 'u32[144,128]{1,0:T(1,128)}', space=vmem, size = 0x12000, scoped, tag = 'internal scratch']
  %s0 = inlined_call_operand.vmem [shape: bf16[128,128], index: 0, kind: input, shape index: {}]
  %s1 = inlined_call_operand.vmem [shape: bf16[128,256], index: 1, kind: input, shape index: {}]
  %s2 = inlined_call_operand.vmem [shape: f32[1,256], index: 2, kind: input, shape index: {}]
  %s3 = inlined_call_operand.vmem [shape: bf16[256,256], index: 3, kind: input, shape index: {}]
  %s4 = inlined_call_operand.vmem [shape: f32[1,256], index: 4, kind: input, shape index: {}]
  %s5 = inlined_call_operand.vmem [shape: bf16[256,128], index: 5, kind: input, shape index: {}]
  %s6 = inlined_call_operand.vmem [shape: f32[1,128], index: 6, kind: input, shape index: {}]
  %s7 = inlined_call_operand.vmem [shape: f32[128,128], index: 7, kind: output, shape index: {}]
  %s8 = sld [smem:[#allocation0]]
  $region38: #{crypto_nn_forward.1} parent=0
    _
  %s10 = ssub.s32 1, %s8
  %s11 = scalar_select 0, %s10, %s8
  // Predicated region
  $region2: #{crypto_nn_forward.1} parent=0 // pred_check
    _
  $region3: #{crypto_nn_forward.1} parent=0 // pred_check_branch
    %13 = sbr.rel (0) target = $region5
  $region4: #{crypto_nn_forward.1} parent=0 // pred_region
    _
  $region5: #{crypto_nn_forward.1} parent=0 // pred_fallthru
    _
  // Predicated region
  $region6: #{crypto_nn_forward.1} parent=0 // pred_check
    _
  $region7: #{crypto_nn_forward.1} parent=0 // pred_check_branch
    %15 = sbr.rel (0) target = $region9
  $region8: #{crypto_nn_forward.1} parent=0 // pred_region
    _
  $region9: #{crypto_nn_forward.1} parent=0 // pred_fallthru
    _
  // Predicated region
  $region10: #{crypto_nn_forward.1} parent=0 // pred_check
    _
  $region11: #{crypto_nn_forward.1} parent=0 // pred_check_branch
    %17 = sbr.rel (0) target = $region13
  $region12: #{crypto_nn_forward.1} parent=0 // pred_region
    _
  $region13: #{crypto_nn_forward.1} parent=0 // pred_fallthru
    _
  // Predicated region
  $region14: #{crypto_nn_forward.1} parent=0 // pred_check
    _
  $region15: #{crypto_nn_forward.1} parent=0 // pred_check_branch
    %19 = sbr.rel (0) target = $region17
  $region16: #{crypto_nn_forward.1} parent=0 // pred_region
    _
  $region17: #{crypto_nn_forward.1} parent=0 // pred_fallthru
    _
  // Predicated region
  $region18: #{crypto_nn_forward.1} parent=0 // pred_check
    _
  $region19: #{crypto_nn_forward.1} parent=0 // pred_check_branch
    %21 = sbr.rel (0) target = $region21
  $region20: #{crypto_nn_forward.1} parent=0 // pred_region
    _
  $region21: #{crypto_nn_forward.1} parent=0 // pred_fallthru
    _
  // Predicated region
  $region22: #{crypto_nn_forward.1} parent=0 // pred_check
    _
  $region23: #{crypto_nn_forward.1} parent=0 // pred_check_branch
    %23 = sbr.rel (0) target = $region25
  $region24: #{crypto_nn_forward.1} parent=0 // pred_region
    _
  $region25: #{crypto_nn_forward.1} parent=0 // pred_fallthru
    _
  // Predicated region
  $region26: #{crypto_nn_forward.1} parent=0 // pred_check
    _
  $region27: #{crypto_nn_forward.1} parent=0 // pred_check_branch
    %25 = sbr.rel (0) target = $region29
  $region28: #{crypto_nn_forward.1} parent=0 // pred_region
    _
  $region29: #{crypto_nn_forward.1} parent=0 // pred_fallthru
    _
  %v27 = vld [vmem:[%s0] sm:$0xf]
  %v28 = vld [vmem:[%s0 + $0x4] sm:$0xf]
  %v29 = vld [vmem:[%s0 + $0x8] sm:$0xf]
  %v30 = vld [vmem:[%s0 + $0xc] sm:$0xf]
  %v31 = vld [vmem:[%s0 + $0x10] sm:$0xf]
  %v32 = vld [vmem:[%s0 + $0x14] sm:$0xf]
  %v33 = vld [vmem:[%s0 + $0x18] sm:$0xf]
  %v34 = vld [vmem:[%s0 + $0x1c] sm:$0xf]
  %v35 = vld [vmem:[%s0 + $0x20] sm:$0xf]
  %v36 = vld [vmem:[%s0 + $0x24] sm:$0xf]
  %v37 = vld [vmem:[%s0 + $0x28] sm:$0xf]
  %v38 = vld [vmem:[%s0 + $0x2c] sm:$0xf]
  %v39 = vld [vmem:[%s0 + $0x30] sm:$0xf]
  %v40 = vld [vmem:[%s0 + $0x34] sm:$0xf]
  %v41 = vld [vmem:[%s0 + $0x38] sm:$0xf]
  %v42 = vld [vmem:[%s0 + $0x3c] sm:$0xf]
  %v43 = vld [vmem:[%s1] sm:$0xff]
  %v44 = vld [vmem:[%s1 + $0x8] sm:$0xff]
  %v45 = vld [vmem:[%s1 + $0x10] sm:$0xff]
  %v46 = vld [vmem:[%s1 + $0x18] sm:$0xff]
  %v47 = vld [vmem:[%s1 + $0x20] sm:$0xff]
  %v48 = vld [vmem:[%s1 + $0x28] sm:$0xff]
  %v49 = vld [vmem:[%s1 + $0x30] sm:$0xff]
  %v50 = vld [vmem:[%s1 + $0x38] sm:$0xff]
  %v51 = vld [vmem:[%s1 + $0x40] sm:$0xff]
  %v52 = vld [vmem:[%s1 + $0x48] sm:$0xff]
  %v53 = vld [vmem:[%s1 + $0x50] sm:$0xff]
  %v54 = vld [vmem:[%s1 + $0x58] sm:$0xff]
  %v55 = vld [vmem:[%s1 + $0x60] sm:$0xff]
  %v56 = vld [vmem:[%s1 + $0x68] sm:$0xff]
  %v57 = vld [vmem:[%s1 + $0x70] sm:$0xff]
  %v58 = vld [vmem:[%s1 + $0x78] sm:$0xff]
  %v59 = vld [vmem:[%s2] sm:$0x3]
  %v61 = vlaneseq
  %v62 = vshrl.u32 %v61, 7
  %v63 = vsub.s32 0, %v62
  %v64 = vrot.slane %v59, %v63
  %v65 = vlaneseq
  %v66 = vshrl.u32 %v65, 7
  %v67 = vsub.s32 1, %v66
  %v68 = vrot.slane %v59, %v67
  %v87 = vunpack.c.l.b16 %v27
  %v88 = vunpack.c.l.b16 %v28
  %v89 = vunpack.c.l.b16 %v29
  %v90 = vunpack.c.l.b16 %v30
  %v91 = vunpack.c.l.b16 %v31
  %v92 = vunpack.c.l.b16 %v32
  %v93 = vunpack.c.l.b16 %v33
  %v94 = vunpack.c.l.b16 %v34
  %v95 = vunpack.c.l.b16 %v35
  %v96 = vunpack.c.l.b16 %v36
  %v97 = vunpack.c.l.b16 %v37
  %v98 = vunpack.c.l.b16 %v38
  %v99 = vunpack.c.l.b16 %v39
  %v100 = vunpack.c.l.b16 %v40
  %v101 = vunpack.c.l.b16 %v41
  %v102 = vunpack.c.l.b16 %v42
  %v103 = vpack.c.b16 %v88, %v87
  %v104 = vpack.c.b16 %v90, %v89
  %v105 = vpack.c.b16 %v92, %v91
  %v106 = vpack.c.b16 %v94, %v93
  %v107 = vpack.c.b16 %v96, %v95
  %v108 = vpack.c.b16 %v98, %v97
  %v109 = vpack.c.b16 %v100, %v99
  %v110 = vpack.c.b16 %v102, %v101
  %v135 = vunpack.c.l.b16 %v43
  %v136 = vunpack.c.h.b16 %v43
  %v137 = vunpack.c.l.b16 %v44
  %v138 = vunpack.c.h.b16 %v44
  %v139 = vunpack.c.l.b16 %v45
  %v140 = vunpack.c.h.b16 %v45
  %v141 = vunpack.c.l.b16 %v46
  %v142 = vunpack.c.h.b16 %v46
  %v143 = vunpack.c.l.b16 %v47
  %v144 = vunpack.c.h.b16 %v47
  %v145 = vunpack.c.l.b16 %v48
  %v146 = vunpack.c.h.b16 %v48
  %v147 = vunpack.c.l.b16 %v49
  %v148 = vunpack.c.h.b16 %v49
  %v149 = vunpack.c.l.b16 %v50
  %v150 = vunpack.c.h.b16 %v50
  %v151 = vunpack.c.l.b16 %v51
  %v152 = vunpack.c.h.b16 %v51
  %v153 = vunpack.c.l.b16 %v52
  %v154 = vunpack.c.h.b16 %v52
  %v155 = vunpack.c.l.b16 %v53
  %v156 = vunpack.c.h.b16 %v53
  %v157 = vunpack.c.l.b16 %v54
  %v158 = vunpack.c.h.b16 %v54
  %v159 = vunpack.c.l.b16 %v55
  %v160 = vunpack.c.h.b16 %v55
  %v161 = vunpack.c.l.b16 %v56
  %v162 = vunpack.c.h.b16 %v56
  %v163 = vunpack.c.l.b16 %v57
  %v164 = vunpack.c.h.b16 %v57
  %v165 = vunpack.c.l.b16 %v58
  %v166 = vunpack.c.h.b16 %v58
  %v167 = vpack.c.b16 %v137, %v135
  %v168 = vpack.c.b16 %v138, %v136
  %v169 = vpack.c.b16 %v141, %v139
  %v170 = vpack.c.b16 %v142, %v140
  %v171 = vpack.c.b16 %v145, %v143
  %v172 = vpack.c.b16 %v146, %v144
  %v173 = vpack.c.b16 %v149, %v147
  %v174 = vpack.c.b16 %v150, %v148
  %v175 = vpack.c.b16 %v153, %v151
  %v176 = vpack.c.b16 %v154, %v152
  %v177 = vpack.c.b16 %v157, %v155
  %v178 = vpack.c.b16 %v158, %v156
  %v179 = vpack.c.b16 %v161, %v159
  %v180 = vpack.c.b16 %v162, %v160
  %v181 = vpack.c.b16 %v165, %v163
  %v182 = vpack.c.b16 %v166, %v164
  %199 = vmatprep.subr.bf16.mxu0 %v182
  %200 = vmatpush1.bf16.msra.mxu0 %v181
  %201 = vmatprep.subr.bf16.mxu0 %v180
  %202 = vmatpush1.bf16.msra.mxu0 %v179
  %203 = vmatprep.subr.bf16.mxu0 %v178
  %204 = vmatpush1.bf16.msra.mxu0 %v177
  %205 = vmatprep.subr.bf16.mxu0 %v176
  %206 = vmatpush1.bf16.msra.mxu0 %v175
  %207 = vmatprep.subr.bf16.mxu0 %v174
  %208 = vmatpush1.bf16.msra.mxu0 %v173
  %209 = vmatprep.subr.bf16.mxu0 %v172
  %210 = vmatpush1.bf16.msra.mxu0 %v171
  %211 = vmatprep.subr.bf16.mxu0 %v170
  %212 = vmatpush1.bf16.msra.mxu0 %v169
  %213 = vmatprep.subr.bf16.mxu0 %v168
  %214 = vmatpush1.bf16.msra.mxu0 %v167
  %215 = vmatprep.subr.bf16.mxu0 0
  %216 = vmatpush2.bf16.msra.mxu0 0
  %217 = vmatprep.subr.bf16.mxu0 0
  %218 = vmatpush2.bf16.msra.mxu0 0
  %219 = vmatprep.subr.bf16.mxu0 0
  %220 = vmatpush2.bf16.msra.mxu0 0
  %221 = vmatprep.subr.bf16.mxu0 0
  %222 = vmatpush2.bf16.msra.mxu0 0
  %223 = vmatprep.subr.bf16.mxu0 0
  %224 = vmatpush2.bf16.msra.mxu0 0
  %225 = vmatprep.subr.bf16.mxu0 0
  %226 = vmatpush2.bf16.msra.mxu0 0
  %227 = vmatprep.subr.bf16.mxu0 0
  %228 = vmatpush2.bf16.msra.mxu0 0
  %229 = vmatprep.subr.bf16.mxu0 0
  %230 = vmatpush2.bf16.msra.mxu0 0
  %231 = vmatprep.mubr.bf16.mxu0 0
  %232 = vmatmul.mubr.bf16.gmra.mxu0 %v103
  %v233 = vpop.f32.mrf.mxu0
  %v234 = vadd.f32 %v64, %v233
  %v235 = vpop.f32.mrf.mxu0
  %v236 = vadd.f32 %v68, %v235
  %v237 = vpop.f32.mrf.mxu0
  %v238 = vadd.f32 %v64, %v237
  %v239 = vpop.f32.mrf.mxu0
  %v240 = vadd.f32 %v68, %v239
  %241 = vmatprep.mubr.bf16.mxu0 0
  %242 = vmatmul.mubr.bf16.gmra.mxu0 %v104
  %v243 = vpop.f32.mrf.mxu0
  %v244 = vadd.f32 %v64, %v243
  %v245 = vpop.f32.mrf.mxu0
  %v246 = vadd.f32 %v68, %v245
  %v247 = vpop.f32.mrf.mxu0
  %v248 = vadd.f32 %v64, %v247
  %v249 = vpop.f32.mrf.mxu0
  %v250 = vadd.f32 %v68, %v249
  %251 = vmatprep.mubr.bf16.mxu0 0
  %252 = vmatmul.mubr.bf16.gmra.mxu0 %v105
  %v253 = vpop.f32.mrf.mxu0
  %v254 = vadd.f32 %v64, %v253
  %v255 = vpop.f32.mrf.mxu0
  %v256 = vadd.f32 %v68, %v255
  %v257 = vpop.f32.mrf.mxu0
  %v258 = vadd.f32 %v64, %v257
  %v259 = vpop.f32.mrf.mxu0
  %v260 = vadd.f32 %v68, %v259
  %261 = vmatprep.mubr.bf16.mxu0 0
  %262 = vmatmul.mubr.bf16.gmra.mxu0 %v106
  %v263 = vpop.f32.mrf.mxu0
  %v264 = vadd.f32 %v64, %v263
  %v265 = vpop.f32.mrf.mxu0
  %v266 = vadd.f32 %v68, %v265
  %v267 = vpop.f32.mrf.mxu0
  %v268 = vadd.f32 %v64, %v267
  %v269 = vpop.f32.mrf.mxu0
  %v270 = vadd.f32 %v68, %v269
  %271 = vmatprep.mubr.bf16.mxu0 0
  %272 = vmatmul.mubr.bf16.gmra.mxu0 %v107
  %v273 = vpop.f32.mrf.mxu0
  %v274 = vadd.f32 %v64, %v273
  %v275 = vpop.f32.mrf.mxu0
  %v276 = vadd.f32 %v68, %v275
  %v277 = vpop.f32.mrf.mxu0
  %v278 = vadd.f32 %v64, %v277
  %v279 = vpop.f32.mrf.mxu0
  %v280 = vadd.f32 %v68, %v279
  %281 = vmatprep.mubr.bf16.mxu0 0
  %282 = vmatmul.mubr.bf16.gmra.mxu0 %v108
  %v283 = vpop.f32.mrf.mxu0
  %v284 = vadd.f32 %v64, %v283
  %v285 = vpop.f32.mrf.mxu0
  %v286 = vadd.f32 %v68, %v285
  %v287 = vpop.f32.mrf.mxu0
  %v288 = vadd.f32 %v64, %v287
  %v289 = vpop.f32.mrf.mxu0
  %v290 = vadd.f32 %v68, %v289
  %291 = vmatprep.mubr.bf16.mxu0 0
  %292 = vmatmul.mubr.bf16.gmra.mxu0 %v109
  %v293 = vpop.f32.mrf.mxu0
  %v294 = vadd.f32 %v64, %v293
  %v295 = vpop.f32.mrf.mxu0
  %v296 = vadd.f32 %v68, %v295
  %v297 = vpop.f32.mrf.mxu0
  %v298 = vadd.f32 %v64, %v297
  %v299 = vpop.f32.mrf.mxu0
  %v300 = vadd.f32 %v68, %v299
  %301 = vmatprep.mubr.bf16.mxu0 0
  %302 = vmatmul.mubr.bf16.gmra.mxu0 %v110
  %v303 = vpop.f32.mrf.mxu0
  %v304 = vadd.f32 %v64, %v303
  %v305 = vpop.f32.mrf.mxu0
  %v306 = vadd.f32 %v68, %v305
  %v307 = vpop.f32.mrf.mxu0
  %v308 = vadd.f32 %v64, %v307
  %v309 = vpop.f32.mrf.mxu0
  %v310 = vadd.f32 %v68, %v309
  %311 = vdwg.mxu0
  %v312 = vmax.f32 %v234, 0.0
  %v313 = vmax.f32 %v236, 0.0
  %v314 = vmax.f32 %v238, 0.0
  %v315 = vmax.f32 %v240, 0.0
  %v316 = vmax.f32 %v244, 0.0
  %v317 = vmax.f32 %v246, 0.0
  %v318 = vmax.f32 %v248, 0.0
  %v319 = vmax.f32 %v250, 0.0
  %v320 = vmax.f32 %v254, 0.0
  %v321 = vmax.f32 %v256, 0.0
  %v322 = vmax.f32 %v258, 0.0
  %v323 = vmax.f32 %v260, 0.0
  %v324 = vmax.f32 %v264, 0.0
  %v325 = vmax.f32 %v266, 0.0
  %v326 = vmax.f32 %v268, 0.0
  %v327 = vmax.f32 %v270, 0.0
  %v328 = vmax.f32 %v274, 0.0
  %v329 = vmax.f32 %v276, 0.0
  %v330 = vmax.f32 %v278, 0.0
  %v331 = vmax.f32 %v280, 0.0
  %v332 = vmax.f32 %v284, 0.0
  %v333 = vmax.f32 %v286, 0.0
  %v334 = vmax.f32 %v288, 0.0
  %v335 = vmax.f32 %v290, 0.0
  %v336 = vmax.f32 %v294, 0.0
  %v337 = vmax.f32 %v296, 0.0
  %v338 = vmax.f32 %v298, 0.0
  %v339 = vmax.f32 %v300, 0.0
  %v340 = vmax.f32 %v304, 0.0
  %v341 = vmax.f32 %v306, 0.0
  %v342 = vmax.f32 %v308, 0.0
  %v343 = vmax.f32 %v310, 0.0
  %v344 = vpack.c.bf16 %v314, %v312
  %v345 = vpack.c.bf16 %v315, %v313
  %v346 = vpack.c.bf16 %v318, %v316
  %v347 = vpack.c.bf16 %v319, %v317
  %v348 = vpack.c.bf16 %v322, %v320
  %v349 = vpack.c.bf16 %v323, %v321
  %v350 = vpack.c.bf16 %v326, %v324
  %v351 = vpack.c.bf16 %v327, %v325
  %v352 = vpack.c.bf16 %v330, %v328
  %v353 = vpack.c.bf16 %v331, %v329
  %v354 = vpack.c.bf16 %v334, %v332
  %v355 = vpack.c.bf16 %v335, %v333
  %v356 = vpack.c.bf16 %v338, %v336
  %v357 = vpack.c.bf16 %v339, %v337
  %v358 = vpack.c.bf16 %v342, %v340
  %v359 = vpack.c.bf16 %v343, %v341
  %v360 = vld [vmem:[%s3] sm:$0xff]
  %v361 = vld [vmem:[%s3 + $0x8] sm:$0xff]
  %v362 = vld [vmem:[%s3 + $0x10] sm:$0xff]
  %v363 = vld [vmem:[%s3 + $0x18] sm:$0xff]
  %v364 = vld [vmem:[%s3 + $0x20] sm:$0xff]
  %v365 = vld [vmem:[%s3 + $0x28] sm:$0xff]
  %v366 = vld [vmem:[%s3 + $0x30] sm:$0xff]
  %v367 = vld [vmem:[%s3 + $0x38] sm:$0xff]
  %v368 = vld [vmem:[%s3 + $0x40] sm:$0xff]
  %v369 = vld [vmem:[%s3 + $0x48] sm:$0xff]
  %v370 = vld [vmem:[%s3 + $0x50] sm:$0xff]
  %v371 = vld [vmem:[%s3 + $0x58] sm:$0xff]
  %v372 = vld [vmem:[%s3 + $0x60] sm:$0xff]
  %v373 = vld [vmem:[%s3 + $0x68] sm:$0xff]
  %v374 = vld [vmem:[%s3 + $0x70] sm:$0xff]
  %v375 = vld [vmem:[%s3 + $0x78] sm:$0xff]
  %v376 = vld [vmem:[%s3 + $0x80] sm:$0xff]
  %v377 = vld [vmem:[%s3 + $0x88] sm:$0xff]
  %v378 = vld [vmem:[%s3 + $0x90] sm:$0xff]
  %v379 = vld [vmem:[%s3 + $0x98] sm:$0xff]
  %v380 = vld [vmem:[%s3 + $0xa0] sm:$0xff]
  %v381 = vld [vmem:[%s3 + $0xa8] sm:$0xff]
  %v382 = vld [vmem:[%s3 + $0xb0] sm:$0xff]
  %v383 = vld [vmem:[%s3 + $0xb8] sm:$0xff]
  %v384 = vld [vmem:[%s3 + $0xc0] sm:$0xff]
  %v385 = vld [vmem:[%s3 + $0xc8] sm:$0xff]
  %v386 = vld [vmem:[%s3 + $0xd0] sm:$0xff]
  %v387 = vld [vmem:[%s3 + $0xd8] sm:$0xff]
  %v388 = vld [vmem:[%s3 + $0xe0] sm:$0xff]
  %v389 = vld [vmem:[%s3 + $0xe8] sm:$0xff]
  %v390 = vld [vmem:[%s3 + $0xf0] sm:$0xff]
  %v391 = vld [vmem:[%s3 + $0xf8] sm:$0xff]
  %v392 = vld [vmem:[%s4] sm:$0x3]
  %v394 = vlaneseq
  %v395 = vshrl.u32 %v394, 7
  %v396 = vsub.s32 0, %v395
  %v397 = vrot.slane %v392, %v396
  %v398 = vlaneseq
  %v399 = vshrl.u32 %v398, 7
  %v400 = vsub.s32 1, %v399
  %v401 = vrot.slane %v392, %v400
  %v436 = vunpack.c.l.b16 %v360
  %v437 = vunpack.c.h.b16 %v360
  %v438 = vunpack.c.l.b16 %v361
  %v439 = vunpack.c.h.b16 %v361
  %v440 = vunpack.c.l.b16 %v362
  %v441 = vunpack.c.h.b16 %v362
  %v442 = vunpack.c.l.b16 %v363
  %v443 = vunpack.c.h.b16 %v363
  %v444 = vunpack.c.l.b16 %v364
  %v445 = vunpack.c.h.b16 %v364
  %v446 = vunpack.c.l.b16 %v365
  %v447 = vunpack.c.h.b16 %v365
  %v448 = vunpack.c.l.b16 %v366
  %v449 = vunpack.c.h.b16 %v366
  %v450 = vunpack.c.l.b16 %v367
  %v451 = vunpack.c.h.b16 %v367
  %v452 = vunpack.c.l.b16 %v368
  %v453 = vunpack.c.h.b16 %v368
  %v454 = vunpack.c.l.b16 %v369
  %v455 = vunpack.c.h.b16 %v369
  %v456 = vunpack.c.l.b16 %v370
  %v457 = vunpack.c.h.b16 %v370
  %v458 = vunpack.c.l.b16 %v371
  %v459 = vunpack.c.h.b16 %v371
  %v460 = vunpack.c.l.b16 %v372
  %v461 = vunpack.c.h.b16 %v372
  %v462 = vunpack.c.l.b16 %v373
  %v463 = vunpack.c.h.b16 %v373
  %v464 = vunpack.c.l.b16 %v374
  %v465 = vunpack.c.h.b16 %v374
  %v466 = vunpack.c.l.b16 %v375
  %v467 = vunpack.c.h.b16 %v375
  %v468 = vunpack.c.l.b16 %v376
  %v469 = vunpack.c.h.b16 %v376
  %v470 = vunpack.c.l.b16 %v377
  %v471 = vunpack.c.h.b16 %v377
  %v472 = vunpack.c.l.b16 %v378
  %v473 = vunpack.c.h.b16 %v378
  %v474 = vunpack.c.l.b16 %v379
  %v475 = vunpack.c.h.b16 %v379
  %v476 = vunpack.c.l.b16 %v380
  %v477 = vunpack.c.h.b16 %v380
  %v478 = vunpack.c.l.b16 %v381
  %v479 = vunpack.c.h.b16 %v381
  %v480 = vunpack.c.l.b16 %v382
  %v481 = vunpack.c.h.b16 %v382
  %v482 = vunpack.c.l.b16 %v383
  %v483 = vunpack.c.h.b16 %v383
  %v484 = vunpack.c.l.b16 %v384
  %v485 = vunpack.c.h.b16 %v384
  %v486 = vunpack.c.l.b16 %v385
  %v487 = vunpack.c.h.b16 %v385
  %v488 = vunpack.c.l.b16 %v386
  %v489 = vunpack.c.h.b16 %v386
  %v490 = vunpack.c.l.b16 %v387
  %v491 = vunpack.c.h.b16 %v387
  %v492 = vunpack.c.l.b16 %v388
  %v493 = vunpack.c.h.b16 %v388
  %v494 = vunpack.c.l.b16 %v389
  %v495 = vunpack.c.h.b16 %v389
  %v496 = vunpack.c.l.b16 %v390
  %v497 = vunpack.c.h.b16 %v390
  %v498 = vunpack.c.l.b16 %v391
  %v499 = vunpack.c.h.b16 %v391
  %v500 = vpack.c.b16 %v438, %v436
  %v501 = vpack.c.b16 %v439, %v437
  %v502 = vpack.c.b16 %v442, %v440
  %v503 = vpack.c.b16 %v443, %v441
  %v504 = vpack.c.b16 %v446, %v444
  %v505 = vpack.c.b16 %v447, %v445
  %v506 = vpack.c.b16 %v450, %v448
  %v507 = vpack.c.b16 %v451, %v449
  %v508 = vpack.c.b16 %v454, %v452
  %v509 = vpack.c.b16 %v455, %v453
  %v510 = vpack.c.b16 %v458, %v456
  %v511 = vpack.c.b16 %v459, %v457
  %v512 = vpack.c.b16 %v462, %v460
  %v513 = vpack.c.b16 %v463, %v461
  %v514 = vpack.c.b16 %v466, %v464
  %v515 = vpack.c.b16 %v467, %v465
  %v516 = vpack.c.b16 %v470, %v468
  %v517 = vpack.c.b16 %v471, %v469
  %v518 = vpack.c.b16 %v474, %v472
  %v519 = vpack.c.b16 %v475, %v473
  %v520 = vpack.c.b16 %v478, %v476
  %v521 = vpack.c.b16 %v479, %v477
  %v522 = vpack.c.b16 %v482, %v480
  %v523 = vpack.c.b16 %v483, %v481
  %v524 = vpack.c.b16 %v486, %v484
  %v525 = vpack.c.b16 %v487, %v485
  %v526 = vpack.c.b16 %v490, %v488
  %v527 = vpack.c.b16 %v491, %v489
  %v528 = vpack.c.b16 %v494, %v492
  %v529 = vpack.c.b16 %v495, %v493
  %v530 = vpack.c.b16 %v498, %v496
  %v531 = vpack.c.b16 %v499, %v497
  %564 = vmatprep.subr.bf16.mxu0 %v515
  %565 = vmatpush1.bf16.msra.mxu0 %v514
  %566 = vmatprep.subr.bf16.mxu0 %v513
  %567 = vmatpush1.bf16.msra.mxu0 %v512
  %568 = vmatprep.subr.bf16.mxu0 %v511
  %569 = vmatpush1.bf16.msra.mxu0 %v510
  %570 = vmatprep.subr.bf16.mxu0 %v509
  %571 = vmatpush1.bf16.msra.mxu0 %v508
  %572 = vmatprep.subr.bf16.mxu0 %v507
  %573 = vmatpush1.bf16.msra.mxu0 %v506
  %574 = vmatprep.subr.bf16.mxu0 %v505
  %575 = vmatpush1.bf16.msra.mxu0 %v504
  %576 = vmatprep.subr.bf16.mxu0 %v503
  %577 = vmatpush1.bf16.msra.mxu0 %v502
  %578 = vmatprep.subr.bf16.mxu0 %v501
  %579 = vmatpush1.bf16.msra.mxu0 %v500
  %580 = vmatprep.subr.bf16.mxu0 %v531
  %581 = vmatpush2.bf16.msra.mxu0 %v530
  %582 = vmatprep.subr.bf16.mxu0 %v529
  %583 = vmatpush2.bf16.msra.mxu0 %v528
  %584 = vmatprep.subr.bf16.mxu0 %v527
  %585 = vmatpush2.bf16.msra.mxu0 %v526
  %586 = vmatprep.subr.bf16.mxu0 %v525
  %587 = vmatpush2.bf16.msra.mxu0 %v524
  %588 = vmatprep.subr.bf16.mxu0 %v523
  %589 = vmatpush2.bf16.msra.mxu0 %v522
  %590 = vmatprep.subr.bf16.mxu0 %v521
  %591 = vmatpush2.bf16.msra.mxu0 %v520
  %592 = vmatprep.subr.bf16.mxu0 %v519
  %593 = vmatpush2.bf16.msra.mxu0 %v518
  %594 = vmatprep.subr.bf16.mxu0 %v517
  %595 = vmatpush2.bf16.msra.mxu0 %v516
  %596 = vmatprep.mubr.bf16.mxu0 %v345
  %597 = vmatmul.mubr.bf16.gmra.mxu0 %v344
  %v598 = vpop.f32.mrf.mxu0
  %v599 = vadd.f32 %v397, %v598
  %v600 = vpop.f32.mrf.mxu0
  %v601 = vadd.f32 %v401, %v600
  %v602 = vpop.f32.mrf.mxu0
  %v603 = vadd.f32 %v397, %v602
  %v604 = vpop.f32.mrf.mxu0
  %v605 = vadd.f32 %v401, %v604
  %606 = vmatprep.mubr.bf16.mxu0 %v347
  %607 = vmatmul.mubr.bf16.gmra.mxu0 %v346
  %v608 = vpop.f32.mrf.mxu0
  %v609 = vadd.f32 %v397, %v608
  %v610 = vpop.f32.mrf.mxu0
  %v611 = vadd.f32 %v401, %v610
  %v612 = vpop.f32.mrf.mxu0
  %v613 = vadd.f32 %v397, %v612
  %v614 = vpop.f32.mrf.mxu0
  %v615 = vadd.f32 %v401, %v614
  %616 = vmatprep.mubr.bf16.mxu0 %v349
  %617 = vmatmul.mubr.bf16.gmra.mxu0 %v348
  %v618 = vpop.f32.mrf.mxu0
  %v619 = vadd.f32 %v397, %v618
  %v620 = vpop.f32.mrf.mxu0
  %v621 = vadd.f32 %v401, %v620
  %v622 = vpop.f32.mrf.mxu0
  %v623 = vadd.f32 %v397, %v622
  %v624 = vpop.f32.mrf.mxu0
  %v625 = vadd.f32 %v401, %v624
  %626 = vmatprep.mubr.bf16.mxu0 %v351
  %627 = vmatmul.mubr.bf16.gmra.mxu0 %v350
  %v628 = vpop.f32.mrf.mxu0
  %v629 = vadd.f32 %v397, %v628
  %v630 = vpop.f32.mrf.mxu0
  %v631 = vadd.f32 %v401, %v630
  %v632 = vpop.f32.mrf.mxu0
  %v633 = vadd.f32 %v397, %v632
  %v634 = vpop.f32.mrf.mxu0
  %v635 = vadd.f32 %v401, %v634
  %636 = vmatprep.mubr.bf16.mxu0 %v353
  %637 = vmatmul.mubr.bf16.gmra.mxu0 %v352
  %v638 = vpop.f32.mrf.mxu0
  %v639 = vadd.f32 %v397, %v638
  %v640 = vpop.f32.mrf.mxu0
  %v641 = vadd.f32 %v401, %v640
  %v642 = vpop.f32.mrf.mxu0
  %v643 = vadd.f32 %v397, %v642
  %v644 = vpop.f32.mrf.mxu0
  %v645 = vadd.f32 %v401, %v644
  %646 = vmatprep.mubr.bf16.mxu0 %v355
  %647 = vmatmul.mubr.bf16.gmra.mxu0 %v354
  %v648 = vpop.f32.mrf.mxu0
  %v649 = vadd.f32 %v397, %v648
  %v650 = vpop.f32.mrf.mxu0
  %v651 = vadd.f32 %v401, %v650
  %v652 = vpop.f32.mrf.mxu0
  %v653 = vadd.f32 %v397, %v652
  %v654 = vpop.f32.mrf.mxu0
  %v655 = vadd.f32 %v401, %v654
  %656 = vmatprep.mubr.bf16.mxu0 %v357
  %657 = vmatmul.mubr.bf16.gmra.mxu0 %v356
  %v658 = vpop.f32.mrf.mxu0
  %v659 = vadd.f32 %v397, %v658
  %v660 = vpop.f32.mrf.mxu0
  %v661 = vadd.f32 %v401, %v660
  %v662 = vpop.f32.mrf.mxu0
  %v663 = vadd.f32 %v397, %v662
  %v664 = vpop.f32.mrf.mxu0
  %v665 = vadd.f32 %v401, %v664
  %666 = vmatprep.mubr.bf16.mxu0 %v359
  %667 = vmatmul.mubr.bf16.gmra.mxu0 %v358
  %v668 = vpop.f32.mrf.mxu0
  %v669 = vadd.f32 %v397, %v668
  %v670 = vpop.f32.mrf.mxu0
  %v671 = vadd.f32 %v401, %v670
  %v672 = vpop.f32.mrf.mxu0
  %v673 = vadd.f32 %v397, %v672
  %v674 = vpop.f32.mrf.mxu0
  %v675 = vadd.f32 %v401, %v674
  %676 = vdwg.mxu0
  %v677 = vmax.f32 %v599, 0.0
  %v678 = vmax.f32 %v601, 0.0
  %v679 = vmax.f32 %v603, 0.0
  %v680 = vmax.f32 %v605, 0.0
  %v681 = vmax.f32 %v609, 0.0
  %v682 = vmax.f32 %v611, 0.0
  %v683 = vmax.f32 %v613, 0.0
  %v684 = vmax.f32 %v615, 0.0
  %v685 = vmax.f32 %v619, 0.0
  %v686 = vmax.f32 %v621, 0.0
  %v687 = vmax.f32 %v623, 0.0
  %v688 = vmax.f32 %v625, 0.0
  %v689 = vmax.f32 %v629, 0.0
  %v690 = vmax.f32 %v631, 0.0
  %v691 = vmax.f32 %v633, 0.0
  %v692 = vmax.f32 %v635, 0.0
  %v693 = vmax.f32 %v639, 0.0
  %v694 = vmax.f32 %v641, 0.0
  %v695 = vmax.f32 %v643, 0.0
  %v696 = vmax.f32 %v645, 0.0
  %v697 = vmax.f32 %v649, 0.0
  %v698 = vmax.f32 %v651, 0.0
  %v699 = vmax.f32 %v653, 0.0
  %v700 = vmax.f32 %v655, 0.0
  %v701 = vmax.f32 %v659, 0.0
  %v702 = vmax.f32 %v661, 0.0
  %v703 = vmax.f32 %v663, 0.0
  %v704 = vmax.f32 %v665, 0.0
  %v705 = vmax.f32 %v669, 0.0
  %v706 = vmax.f32 %v671, 0.0
  %v707 = vmax.f32 %v673, 0.0
  %v708 = vmax.f32 %v675, 0.0
  %v709 = vpack.c.bf16 %v679, %v677
  %v710 = vpack.c.bf16 %v680, %v678
  %v711 = vpack.c.bf16 %v683, %v681
  %v712 = vpack.c.bf16 %v684, %v682
  %v713 = vpack.c.bf16 %v687, %v685
  %v714 = vpack.c.bf16 %v688, %v686
  %v715 = vpack.c.bf16 %v691, %v689
  %v716 = vpack.c.bf16 %v692, %v690
  %v717 = vpack.c.bf16 %v695, %v693
  %v718 = vpack.c.bf16 %v696, %v694
  %v719 = vpack.c.bf16 %v699, %v697
  %v720 = vpack.c.bf16 %v700, %v698
  %v721 = vpack.c.bf16 %v703, %v701
  %v722 = vpack.c.bf16 %v704, %v702
  %v723 = vpack.c.bf16 %v707, %v705
  %v724 = vpack.c.bf16 %v708, %v706
  %v725 = vld [vmem:[%s5] sm:$0xf]
  %v726 = vld [vmem:[%s5 + $0x4] sm:$0xf]
  %v727 = vld [vmem:[%s5 + $0x8] sm:$0xf]
  %v728 = vld [vmem:[%s5 + $0xc] sm:$0xf]
  %v729 = vld [vmem:[%s5 + $0x10] sm:$0xf]
  %v730 = vld [vmem:[%s5 + $0x14] sm:$0xf]
  %v731 = vld [vmem:[%s5 + $0x18] sm:$0xf]
  %v732 = vld [vmem:[%s5 + $0x1c] sm:$0xf]
  %v733 = vld [vmem:[%s5 + $0x20] sm:$0xf]
  %v734 = vld [vmem:[%s5 + $0x24] sm:$0xf]
  %v735 = vld [vmem:[%s5 + $0x28] sm:$0xf]
  %v736 = vld [vmem:[%s5 + $0x2c] sm:$0xf]
  %v737 = vld [vmem:[%s5 + $0x30] sm:$0xf]
  %v738 = vld [vmem:[%s5 + $0x34] sm:$0xf]
  %v739 = vld [vmem:[%s5 + $0x38] sm:$0xf]
  %v740 = vld [vmem:[%s5 + $0x3c] sm:$0xf]
  %v741 = vld [vmem:[%s5 + $0x40] sm:$0xf]
  %v742 = vld [vmem:[%s5 + $0x44] sm:$0xf]
  %v743 = vld [vmem:[%s5 + $0x48] sm:$0xf]
  %v744 = vld [vmem:[%s5 + $0x4c] sm:$0xf]
  %v745 = vld [vmem:[%s5 + $0x50] sm:$0xf]
  %v746 = vld [vmem:[%s5 + $0x54] sm:$0xf]
  %v747 = vld [vmem:[%s5 + $0x58] sm:$0xf]
  %v748 = vld [vmem:[%s5 + $0x5c] sm:$0xf]
  %v749 = vld [vmem:[%s5 + $0x60] sm:$0xf]
  %v750 = vld [vmem:[%s5 + $0x64] sm:$0xf]
  %v751 = vld [vmem:[%s5 + $0x68] sm:$0xf]
  %v752 = vld [vmem:[%s5 + $0x6c] sm:$0xf]
  %v753 = vld [vmem:[%s5 + $0x70] sm:$0xf]
  %v754 = vld [vmem:[%s5 + $0x74] sm:$0xf]
  %v755 = vld [vmem:[%s5 + $0x78] sm:$0xf]
  %v756 = vld [vmem:[%s5 + $0x7c] sm:$0xf]
  %v757 = vld [vmem:[%s6] sm:$0x1]
  %v759 = vlaneseq
  %v760 = vshrl.u32 %v759, 7
  %v761 = vsub.s32 0, %v760
  %v762 = vrot.slane %v757, %v761
  %v796 = vunpack.c.l.b16 %v725
  %v797 = vunpack.c.l.b16 %v726
  %v798 = vunpack.c.l.b16 %v727
  %v799 = vunpack.c.l.b16 %v728
  %v800 = vunpack.c.l.b16 %v729
  %v801 = vunpack.c.l.b16 %v730
  %v802 = vunpack.c.l.b16 %v731
  %v803 = vunpack.c.l.b16 %v732
  %v804 = vunpack.c.l.b16 %v733
  %v805 = vunpack.c.l.b16 %v734
  %v806 = vunpack.c.l.b16 %v735
  %v807 = vunpack.c.l.b16 %v736
  %v808 = vunpack.c.l.b16 %v737
  %v809 = vunpack.c.l.b16 %v738
  %v810 = vunpack.c.l.b16 %v739
  %v811 = vunpack.c.l.b16 %v740
  %v812 = vunpack.c.l.b16 %v741
  %v813 = vunpack.c.l.b16 %v742
  %v814 = vunpack.c.l.b16 %v743
  %v815 = vunpack.c.l.b16 %v744
  %v816 = vunpack.c.l.b16 %v745
  %v817 = vunpack.c.l.b16 %v746
  %v818 = vunpack.c.l.b16 %v747
  %v819 = vunpack.c.l.b16 %v748
  %v820 = vunpack.c.l.b16 %v749
  %v821 = vunpack.c.l.b16 %v750
  %v822 = vunpack.c.l.b16 %v751
  %v823 = vunpack.c.l.b16 %v752
  %v824 = vunpack.c.l.b16 %v753
  %v825 = vunpack.c.l.b16 %v754
  %v826 = vunpack.c.l.b16 %v755
  %v827 = vunpack.c.l.b16 %v756
  %v828 = vpack.c.b16 %v797, %v796
  %v829 = vpack.c.b16 %v799, %v798
  %v830 = vpack.c.b16 %v801, %v800
  %v831 = vpack.c.b16 %v803, %v802
  %v832 = vpack.c.b16 %v805, %v804
  %v833 = vpack.c.b16 %v807, %v806
  %v834 = vpack.c.b16 %v809, %v808
  %v835 = vpack.c.b16 %v811, %v810
  %v836 = vpack.c.b16 %v813, %v812
  %v837 = vpack.c.b16 %v815, %v814
  %v838 = vpack.c.b16 %v817, %v816
  %v839 = vpack.c.b16 %v819, %v818
  %v840 = vpack.c.b16 %v821, %v820
  %v841 = vpack.c.b16 %v823, %v822
  %v842 = vpack.c.b16 %v825, %v824
  %v843 = vpack.c.b16 %v827, %v826
  %860 = vmatprep.subr.bf16.mxu0 0
  %861 = vmatpush1.bf16.msra.mxu0 %v835
  %862 = vmatprep.subr.bf16.mxu0 0
  %863 = vmatpush1.bf16.msra.mxu0 %v834
  %864 = vmatprep.subr.bf16.mxu0 0
  %865 = vmatpush1.bf16.msra.mxu0 %v833
  %866 = vmatprep.subr.bf16.mxu0 0
  %867 = vmatpush1.bf16.msra.mxu0 %v832
  %868 = vmatprep.subr.bf16.mxu0 0
  %869 = vmatpush1.bf16.msra.mxu0 %v831
  %870 = vmatprep.subr.bf16.mxu0 0
  %871 = vmatpush1.bf16.msra.mxu0 %v830
  %872 = vmatprep.subr.bf16.mxu0 0
  %873 = vmatpush1.bf16.msra.mxu0 %v829
  %874 = vmatprep.subr.bf16.mxu0 0
  %875 = vmatpush1.bf16.msra.mxu0 %v828
  %876 = vmatprep.subr.bf16.mxu0 0
  %877 = vmatpush2.bf16.msra.mxu0 %v843
  %878 = vmatprep.subr.bf16.mxu0 0
  %879 = vmatpush2.bf16.msra.mxu0 %v842
  %880 = vmatprep.subr.bf16.mxu0 0
  %881 = vmatpush2.bf16.msra.mxu0 %v841
  %882 = vmatprep.subr.bf16.mxu0 0
  %883 = vmatpush2.bf16.msra.mxu0 %v840
  %884 = vmatprep.subr.bf16.mxu0 0
  %885 = vmatpush2.bf16.msra.mxu0 %v839
  %886 = vmatprep.subr.bf16.mxu0 0
  %887 = vmatpush2.bf16.msra.mxu0 %v838
  %888 = vmatprep.subr.bf16.mxu0 0
  %889 = vmatpush2.bf16.msra.mxu0 %v837
  %890 = vmatprep.subr.bf16.mxu0 0
  %891 = vmatpush2.bf16.msra.mxu0 %v836
  %892 = vmatprep.mubr.bf16.mxu0 %v710
  %893 = vmatmul.mubr.bf16.gmra.mxu0 %v709
  %v894 = vpop.f32.mrf.mxu0
  %v895 = vadd.f32 %v762, %v894
  %v896 = vpop.f32.mrf.mxu0
  %v897 = vpop.f32.mrf.mxu0
  %v898 = vadd.f32 %v762, %v897
  %v899 = vpop.f32.mrf.mxu0
  %900 = vmatprep.mubr.bf16.mxu0 %v712
  %901 = vmatmul.mubr.bf16.gmra.mxu0 %v711
  %v902 = vpop.f32.mrf.mxu0
  %v903 = vadd.f32 %v762, %v902
  %v904 = vpop.f32.mrf.mxu0
  %v905 = vpop.f32.mrf.mxu0
  %v906 = vadd.f32 %v762, %v905
  %v907 = vpop.f32.mrf.mxu0
  %908 = vmatprep.mubr.bf16.mxu0 %v714
  %909 = vmatmul.mubr.bf16.gmra.mxu0 %v713
  %v910 = vpop.f32.mrf.mxu0
  %v911 = vadd.f32 %v762, %v910
  %v912 = vpop.f32.mrf.mxu0
  %v913 = vpop.f32.mrf.mxu0
  %v914 = vadd.f32 %v762, %v913
  %v915 = vpop.f32.mrf.mxu0
  %916 = vmatprep.mubr.bf16.mxu0 %v716
  %917 = vmatmul.mubr.bf16.gmra.mxu0 %v715
  %v918 = vpop.f32.mrf.mxu0
  %v919 = vadd.f32 %v762, %v918
  %v920 = vpop.f32.mrf.mxu0
  %v921 = vpop.f32.mrf.mxu0
  %v922 = vadd.f32 %v762, %v921
  %v923 = vpop.f32.mrf.mxu0
  %924 = vmatprep.mubr.bf16.mxu0 %v718
  %925 = vmatmul.mubr.bf16.gmra.mxu0 %v717
  %v926 = vpop.f32.mrf.mxu0
  %v927 = vadd.f32 %v762, %v926
  %v928 = vpop.f32.mrf.mxu0
  %v929 = vpop.f32.mrf.mxu0
  %v930 = vadd.f32 %v762, %v929
  %v931 = vpop.f32.mrf.mxu0
  %932 = vmatprep.mubr.bf16.mxu0 %v720
  %933 = vmatmul.mubr.bf16.gmra.mxu0 %v719
  %v934 = vpop.f32.mrf.mxu0
  %v935 = vadd.f32 %v762, %v934
  %v936 = vpop.f32.mrf.mxu0
  %v937 = vpop.f32.mrf.mxu0
  %v938 = vadd.f32 %v762, %v937
  %v939 = vpop.f32.mrf.mxu0
  %940 = vmatprep.mubr.bf16.mxu0 %v722
  %941 = vmatmul.mubr.bf16.gmra.mxu0 %v721
  %v942 = vpop.f32.mrf.mxu0
  %v943 = vadd.f32 %v762, %v942
  %v944 = vpop.f32.mrf.mxu0
  %v945 = vpop.f32.mrf.mxu0
  %v946 = vadd.f32 %v762, %v945
  %v947 = vpop.f32.mrf.mxu0
  %948 = vmatprep.mubr.bf16.mxu0 %v724
  %949 = vmatmul.mubr.bf16.gmra.mxu0 %v723
  %v950 = vpop.f32.mrf.mxu0
  %v951 = vadd.f32 %v762, %v950
  %v952 = vpop.f32.mrf.mxu0
  %v953 = vpop.f32.mrf.mxu0
  %v954 = vadd.f32 %v762, %v953
  %v955 = vpop.f32.mrf.mxu0
  %956 = vdwg.mxu0
  %957 = vst [vmem:[%s7] sm:$0xff] %v895
  %958 = vst [vmem:[%s7 + $0x8] sm:$0xff] %v898
  %959 = vst [vmem:[%s7 + $0x10] sm:$0xff] %v903
  %960 = vst [vmem:[%s7 + $0x18] sm:$0xff] %v906
  %961 = vst [vmem:[%s7 + $0x20] sm:$0xff] %v911
  %962 = vst [vmem:[%s7 + $0x28] sm:$0xff] %v914
  %963 = vst [vmem:[%s7 + $0x30] sm:$0xff] %v919
  %964 = vst [vmem:[%s7 + $0x38] sm:$0xff] %v922
  %965 = vst [vmem:[%s7 + $0x40] sm:$0xff] %v927
  %966 = vst [vmem:[%s7 + $0x48] sm:$0xff] %v930
  %967 = vst [vmem:[%s7 + $0x50] sm:$0xff] %v935
  %968 = vst [vmem:[%s7 + $0x58] sm:$0xff] %v938
  %969 = vst [vmem:[%s7 + $0x60] sm:$0xff] %v943
  %970 = vst [vmem:[%s7 + $0x68] sm:$0xff] %v946
  %971 = vst [vmem:[%s7 + $0x70] sm:$0xff] %v951
  %972 = vst [vmem:[%s7 + $0x78] sm:$0xff] %v954
  // Predicated region
  $region30: #{crypto_nn_forward.1} parent=0 // pred_check
    _
  $region31: #{crypto_nn_forward.1} parent=0 // pred_check_branch
    %974 = sbr.rel (0) target = $region33
  $region32: #{crypto_nn_forward.1} parent=0 // pred_region
    _
  $region33: #{crypto_nn_forward.1} parent=0 // pred_fallthru
    _
  // Predicated region
  $region34: #{crypto_nn_forward.1} parent=0 // pred_check
    _
  $region35: #{crypto_nn_forward.1} parent=0 // pred_check_branch
    %976 = sbr.rel (0) target = $region37
  $region36: #{crypto_nn_forward.1} parent=0 // pred_region
    _
  $region37: #{crypto_nn_forward.1} parent=0 // pred_fallthru
    _

</llo_original>
